<compile_context>
chip_gen: v7x
topology: tpu7x:2x2x1
jax: 0.10.0
libtpu: 0.0.40
codegen_flags: <defaults>
</compile_context>

<pallas_src>
import math

import jax
import jax.numpy as jnp
from jax.experimental import pallas as pl
from jax.experimental.pallas import tpu as pltpu

_MIB = 1 << 20


# ----------------------------------------------------------------------------
# pe buffer construction — replicates PositionalEncoding.__init__ exactly
# (including the odd-d_model round-up-then-slice behaviour).
# ----------------------------------------------------------------------------
def build_pe(d_model: int, max_len: int = 5000) -> jnp.ndarray:
    r = d_model % 2
    dm = d_model + r
    position = jnp.arange(0, max_len, dtype=jnp.float32)[:, None]            # (max_len, 1)
    div_term = jnp.exp(
        jnp.arange(0, dm, 2, dtype=jnp.float32) * (-math.log(10000.0) / dm)
    )                                                                         # (dm/2,)
    pe = jnp.zeros((max_len, dm), dtype=jnp.float32)
    pe = pe.at[:, 0::2].set(jnp.sin(position * div_term))
    pe = pe.at[:, 1::2].set(jnp.cos(position * div_term))
    # unsqueeze(0).transpose(0, 1) -> (max_len, 1, dm), slice back to d_model
    return pe[:, None, :][:, :, :d_model]                                     # (max_len, 1, d_model)


# ----------------------------------------------------------------------------
# Kernels
# ----------------------------------------------------------------------------
def _make_flat_kernel(batch: int, d_model: int):
    """x/out tiles are dense (block_s, B*D); pe tile is (block_s, D).
    Adds pe to each lane-aligned batch slice (static unroll, D % 128 == 0
    or B == 1, so every load/add/store is unmasked and lane-dense)."""

    def kernel(x_ref, pe_ref, o_ref):
        dt = o_ref.dtype
        pe = pe_ref[...].astype(dt)                    # loaded once per grid step
        for b in range(batch):                         # static Python unroll
            sl = slice(b * d_model, (b + 1) * d_model)
            o_ref[:, sl] = x_ref[:, sl].astype(dt) + pe

    return kernel


def _bcast_kernel(x_ref, pe_ref, o_ref):
    """x/out tiles are (block_s, B, D); pe tile is (block_s, 1, D) and
    broadcasts over the batch (sublane) dim."""
    dt = o_ref.dtype
    o_ref[...] = x_ref[...].astype(dt) + pe_ref[...].astype(dt)


# ----------------------------------------------------------------------------
# Sizing helpers
# ----------------------------------------------------------------------------
def _round_up(v: int, m: int) -> int:
    return -(-v // m) * m


def _sublane_multiple(dtype) -> int:
    # 8 rows for 32-bit, 16 for bf16/f16, 32 for int8/fp8 (sublane packing).
    return max(8, 32 // jnp.dtype(dtype).itemsize)


def _vmem_tile_bytes(rows: int, cols: int, dtype, lead: int = 1) -> int:
    sub = _sublane_multiple(dtype)
    return lead * _round_up(rows, sub) * _round_up(cols, 128) * jnp.dtype(dtype).itemsize


def _vmem_capacity_bytes() -> int:
    try:
        cap = getattr(pltpu.get_tpu_info(), "vmem_capacity_bytes", None)
        if cap:
            return int(cap)
    except Exception:
        pass
    return 128 * _MIB  # v5e / v6e assumption if the query is unavailable


def _choose_block_s(S: int, vmem_row_bytes: int, hbm_row_bytes: int, sub: int,
                    target_tile: int = 4 * _MIB, min_tile: int = 1 * _MIB) -> int:
    """Sequence-tile size: ~4 MiB of VMEM per x tile, multiple of the dtype's
    sublane count.  If the whole sequence fits one tile, split it in two for
    the v7x megacore / pipeline overlap — but only while each half still moves
    >= ~1 MiB of HBM data (smaller tiles fall off the measured BW roofline)."""
    if S <= sub:
        return S
    block_s = (target_tile // max(vmem_row_bytes, 1)) // sub * sub
    block_s = max(sub, block_s)
    if block_s >= S:
        half = _round_up(-(-S // 2), sub)
        if half < S and half * hbm_row_bytes >= min_tile:
            return half
        return S
    return block_s


# ----------------------------------------------------------------------------
# Forward wrapper
# ----------------------------------------------------------------------------
def positional_encoding_forward(x: jnp.ndarray, pe: jnp.ndarray,
                                *, block_s: int | None = None) -> jnp.ndarray:
    """x: [S, B, D]; pe: [max_len, 1, D] (or [max_len, D]), max_len >= S.
    Returns x + pe[:S] with numpy/torch-style dtype promotion."""
    S, B, D = x.shape

    if pe.ndim == 3:
        if pe.shape[1] != 1 or pe.shape[2] != D:
            raise ValueError(f"pe shape {pe.shape} incompatible with d_model={D}")
        pe3 = pe
    elif pe.ndim == 2:
        if pe.shape[1] != D:
            raise ValueError(f"pe shape {pe.shape} incompatible with d_model={D}")
        pe3 = pe[:, None, :]
    else:
        raise ValueError(f"pe must be 2D or 3D, got shape {pe.shape}")
    if pe3.shape[0] < S:
        raise ValueError(f"sequence length {S} exceeds positional table max_len {pe3.shape[0]}")

    out_dtype = jnp.promote_types(x.dtype, pe3.dtype)   # matches torch (f32 buffer promotes)
    x_isz = jnp.dtype(x.dtype).itemsize
    sub = max(_sublane_multiple(x.dtype), _sublane_multiple(out_dtype),
              _sublane_multiple(pe3.dtype))

    # Lane-dense flattened path when batch slices stay lane-aligned.
    use_flat = (B == 1) or (D % 128 == 0 and B <= 64)
    BD = B * D

    if use_flat:
        vmem_row = _round_up(BD, 128) * x_isz
    else:
        vmem_row = _round_up(B, _sublane_multiple(x.dtype)) * _round_up(D, 128) * x_isz
    hbm_row = BD * x_isz

    if block_s is None:
        block_s = _choose_block_s(S, vmem_row, hbm_row, sub)
    else:
        block_s = max(1, min(int(block_s), S))
        if block_s < S:
            block_s = min(S, max(sub, (block_s // sub) * sub))
    num_blocks = pl.cdiv(S, block_s)

    # Generation-aware VMEM budget: actual double-buffered need + slack,
    # capped below physical (64 MiB on v7x, 128 MiB on v5e/v6e).
    if use_flat:
        x_t = _vmem_tile_bytes(block_s, BD, x.dtype)
        o_t = _vmem_tile_bytes(block_s, BD, out_dtype)
        pe_t = _vmem_tile_bytes(block_s, D, pe3.dtype)
    else:
        x_t = _vmem_tile_bytes(B, D, x.dtype, lead=block_s)
        o_t = _vmem_tile_bytes(B, D, out_dtype, lead=block_s)
        pe_t = _vmem_tile_bytes(1, D, pe3.dtype, lead=block_s)
    need = 2 * (x_t + o_t + pe_t) + 2 * _MIB
    cap = 40 * _MIB if _vmem_capacity_bytes() <= 64 * _MIB else 48 * _MIB
    vmem_limit = int(min(cap, max(need, 4 * _MIB)))

    cparams = pltpu.CompilerParams(
        dimension_semantics=("parallel",),
        vmem_limit_bytes=vmem_limit,
    )

    if use_flat:
        x2 = x.reshape(S, BD)                       # free: [S,B,D] is contiguous
        pe2 = pe3.reshape(pe3.shape[0], D)          # free: middle dim is 1
        out = pl.pallas_call(
            _make_flat_kernel(B, D),
            out_shape=jax.ShapeDtypeStruct((S, BD), out_dtype),
            grid_spec=pltpu.PrefetchScalarGridSpec(
                num_scalar_prefetch=0,
                grid=(num_blocks,),
                in_specs=[
                    pl.BlockSpec((block_s, BD), lambda s: (s, 0)),
                    pl.BlockSpec((block_s, D), lambda s: (s, 0)),
                ],
                out_specs=pl.BlockSpec((block_s, BD), lambda s: (s, 0)),
            ),
            compiler_params=cparams,
        )(x2, pe2)
        return out.reshape(S, B, D)

    out = pl.pallas_call(
        _bcast_kernel,
        out_shape=jax.ShapeDtypeStruct((S, B, D), out_dtype),
        grid_spec=pltpu.PrefetchScalarGridSpec(
            num_scalar_prefetch=0,
            grid=(num_blocks,),
            in_specs=[
                pl.BlockSpec((block_s, B, D), lambda s: (s, 0, 0)),
                pl.BlockSpec((block_s, 1, D), lambda s: (s, 0, 0)),
            ],
            out_specs=pl.BlockSpec((block_s, B, D), lambda s: (s, 0, 0)),
        ),
        compiler_params=cparams,
    )(x, pe3)
    return out


# ----------------------------------------------------------------------------
# Self-test
# ----------------------------------------------------------------------------
if __name__ == "__main__":
    root_key = jax.random.PRNGKey(0)
    k1, k2, k3 = jax.random.split(root_key, 3)

    # --- Check 1: lane-dense flattened path (D % 128 == 0) --------------------
    S, B, D = 64, 2, 128
    x = jax.random.normal(k1, (S, B, D), dtype=jnp.float32)
    pe = build_pe(D, max_len=256)
    out = jax.block_until_ready(positional_encoding_forward(x, pe))
    ref = x + pe[:S]
    assert out.shape == (S, B, D) and out.dtype == jnp.float32
    assert jnp.allclose(out, ref, atol=1e-6), "mismatch vs reference (check 1)"

    # --- Check 2: odd d_model (round-up-then-slice), ragged D -> 3D broadcast
    #     path; run once with full-seq block and once with a multi-step grid
    #     (partial last block).
    S2, B2, D2 = 20, 2, 33
    x2 = jax.random.normal(k2, (S2, B2, D2), dtype=jnp.float32)
    pe2 = build_pe(D2, max_len=64)
    ref2 = x2 + pe2[:S2]
    out2a = jax.block_until_ready(positional_encoding_forward(x2, pe2))
    out2b = jax.block_until_ready(positional_encoding_forward(x2, pe2, block_s=8))
    assert out2a.shape == (S2, B2, D2) and out2b.shape == (S2, B2, D2)
    assert jnp.allclose(out2a, ref2, atol=1e-6), "mismatch vs reference (check 2a)"
    assert jnp.allclose(out2b, ref2, atol=1e-6), "mismatch vs reference (check 2b)"

    # --- Check 3: bf16 input, B == 1 -> flattened path, f32 output (matches
    #     torch promotion against the f32 pe buffer).
    S3, B3, D3 = 32, 1, 128
    x3 = jax.random.normal(k3, (S3, B3, D3), dtype=jnp.bfloat16)
    pe3 = build_pe(D3, max_len=64)
    out3 = jax.block_until_ready(positional_encoding_forward(x3, pe3))
    ref3 = x3.astype(jnp.float32) + pe3[:S3]
    assert out3.shape == (S3, B3, D3) and out3.dtype == jnp.float32
    assert jnp.allclose(out3, ref3, atol=1e-6), "mismatch vs reference (check 3)"

    print("KERNEL_OK")
</pallas_src>

<mosaic_0001>
module attributes {stable_mosaic.version = 11 : i64} {
  func.func @kernel(%arg0: i32, %arg1: memref<64x256xf32, #tpu.memory_space<vmem>>, %arg2: memref<64x128xf32, #tpu.memory_space<vmem>>, %arg3: memref<64x256xf32, #tpu.memory_space<vmem>>) attributes {dimension_semantics = [#tpu.dimension_semantics<parallel>], iteration_bounds = array<i64: 1>, scalar_prefetch = 0 : i64, scratch_operands = 0 : i64, tpu.core_type = #tpu.core_type<tc>, window_params = [{transform_indices = @transform_0, window_bounds = array<i64: 64, 256>}, {transform_indices = @transform_1, window_bounds = array<i64: 64, 128>}, {transform_indices = @transform_2, window_bounds = array<i64: 64, 256>}]} {
    %c0 = arith.constant 0 : index
    %c0_0 = arith.constant 0 : index
    %0 = vector.load %arg2[%c0, %c0_0] : memref<64x128xf32, #tpu.memory_space<vmem>>, vector<64x128xf32>
    %c0_1 = arith.constant 0 : index
    %c0_2 = arith.constant 0 : index
    %1 = vector.load %arg1[%c0_1, %c0_2] : memref<64x256xf32, #tpu.memory_space<vmem>>, vector<64x128xf32>
    %2 = arith.addf %1, %0 : vector<64x128xf32>
    %c0_3 = arith.constant 0 : index
    %c0_4 = arith.constant 0 : index
    %3 = vector.load %arg3[%c0_3, %c0_4] : memref<64x256xf32, #tpu.memory_space<vmem>>, vector<64x128xf32>
    tpu.vector_store %arg3[%c0_3, %c0_4], %2 {strides = array<i32>} : memref<64x256xf32, #tpu.memory_space<vmem>>, vector<64x128xf32>,
    %c0_5 = arith.constant 0 : index
    %c128 = arith.constant 128 : index
    %4 = vector.load %arg1[%c0_5, %c128] : memref<64x256xf32, #tpu.memory_space<vmem>>, vector<64x128xf32>
    %5 = arith.addf %4, %0 : vector<64x128xf32>
    %c0_6 = arith.constant 0 : index
    %c128_7 = arith.constant 128 : index
    %6 = vector.load %arg3[%c0_6, %c128_7] : memref<64x256xf32, #tpu.memory_space<vmem>>, vector<64x128xf32>
    tpu.vector_store %arg3[%c0_6, %c128_7], %5 {strides = array<i32>} : memref<64x256xf32, #tpu.memory_space<vmem>>, vector<64x128xf32>,
    return
  }
  func.func @transform_0(%arg0: i32) -> (i32, i32) {
    %c0_i32 = arith.constant 0 : i32
    %c0_i32_0 = arith.constant 0 : i32
    return %arg0, %c0_i32 : i32, i32
  }
  func.func @transform_1(%arg0: i32) -> (i32, i32) {
    %c0_i32 = arith.constant 0 : i32
    %c0_i32_0 = arith.constant 0 : i32
    return %arg0, %c0_i32 : i32, i32
  }
  func.func @transform_2(%arg0: i32) -> (i32, i32) {
    %c0_i32 = arith.constant 0 : i32
    %c0_i32_0 = arith.constant 0 : i32
    return %arg0, %c0_i32 : i32, i32
  }
}

</mosaic_0001>

<llo_original>
// kernel: tpu_custom_call.1
$region0: #{tpu_custom_call.1}
  #allocation0 [shape = 'u32[]', space=smem, size = 0x4, offset = 0x4, fixed_abs, tag = 'smem constant byte address 0x4 - core index']
  #allocation1 [shape = 'u32[144,128]{1,0:T(1,128)}', space=vmem, size = 0x12000, scoped, tag = 'internal scratch']
  %s0 = inlined_call_operand.hbm [shape: f32[64,256], index: 0, kind: input, shape index: {}]
  %s1 = inlined_call_operand.hbm [shape: f32[256,128], index: 1, kind: input, shape index: {}]
  %s2 = inlined_call_operand.hbm [shape: f32[64,256], index: 2, kind: output, shape index: {}]
  %s3 = sld [smem:[#allocation0]]
  $region26: #{tpu_custom_call.1} parent=0
    _
  %s5 = ssub.s32 1, %s3
  %s6 = scalar_select 0, %s5, %s3
  $region1: #{tpu_custom_call.1} parent=0
    #allocation2 [shape = 'u8[65536]{0}', space=vmem, size = 0x10000, scoped, tag = 'input window, operand 0, single buffered']
    #allocation3 [shape = 's32[1]{0}', space=sflag, size = 0x4, scoped, tag = 'scoped memory for tpu_custom_call.1']
    #allocation4 [shape = 's32[1]{0}', space=sflag, size = 0x4, scoped, tag = 'scoped memory for tpu_custom_call.1']
    #allocation5 [shape = 'u8[32768]{0}', space=vmem, size = 0x8000, scoped, tag = 'input window, operand 1, single buffered']
    #allocation6 [shape = 's32[1]{0}', space=sflag, size = 0x4, scoped, tag = 'scoped memory for tpu_custom_call.1']
    #allocation7 [shape = 'u8[65536]{0}', space=vmem, size = 0x10000, scoped, tag = 'output window, operand 0, single buffered']
    %7 = vsyncpa [#allocation3], 0
    %8 = vsyncpa [#allocation6], 0
    %9 = vsyncpa [#allocation4], 0
    // Predicated region
    $region2: #{tpu_custom_call.1} parent=1 // pred_check
      _
    $region3: #{tpu_custom_call.1} parent=1 // pred_check_branch
      %11 = sbr.rel (0) target = $region5
    $region4: #{tpu_custom_call.1} parent=1 // pred_region
      %s13 = ssub.s32 2048, 2048
      %14 = vsyncadd [#allocation3], %s13
      %s15 = sshll.u32 [#allocation2], 4
      %s16 = int_to_ptr.vmem [resolvable:$true] %s15
      %21 = dma.hbm_to_vmem [thread:$0]  %s0, 2048, %s16, [#allocation3], 256, 256, 16
    $region5: #{tpu_custom_call.1} parent=1 // pred_fallthru
      _
    // Predicated region
    $region6: #{tpu_custom_call.1} parent=1 // pred_check
      _
    $region7: #{tpu_custom_call.1} parent=1 // pred_check_branch
      %23 = sbr.rel (0) target = $region9
    $region8: #{tpu_custom_call.1} parent=1 // pred_region
      %s25 = ssub.s32 1024, 1024
      %26 = vsyncadd [#allocation6], %s25
      %s27 = sshll.u32 [#allocation5], 4
      %s28 = int_to_ptr.vmem [resolvable:$true] %s27
      %33 = dma.hbm_to_vmem [thread:$0]  %s1, 1024, %s28, [#allocation6], 128, 128, 8
    $region9: #{tpu_custom_call.1} parent=1 // pred_fallthru
      _
    // Predicated region
    $region10: #{tpu_custom_call.1} parent=1 // pred_check
      _
    $region11: #{tpu_custom_call.1} parent=1 // pred_check_branch
      %35 = sbr.rel (0) target = $region13
    $region12: #{tpu_custom_call.1} parent=1 // pred_region
      %36 = dma.done [#allocation3], 2048
    $region13: #{tpu_custom_call.1} parent=1 // pred_fallthru
      _
    // Predicated region
    $region14: #{tpu_custom_call.1} parent=1 // pred_check
      _
    $region15: #{tpu_custom_call.1} parent=1 // pred_check_branch
      %38 = sbr.rel (0) target = $region17
    $region16: #{tpu_custom_call.1} parent=1 // pred_region
      %39 = dma.done [#allocation6], 1024
    $region17: #{tpu_custom_call.1} parent=1 // pred_fallthru
      _
    %v40 = vld [vmem:[#allocation5] sm:$0xff]
    %v41 = vld [vmem:[#allocation5 + $0x8] sm:$0xff]
    %v42 = vld [vmem:[#allocation5 + $0x10] sm:$0xff]
    %v43 = vld [vmem:[#allocation5 + $0x18] sm:$0xff]
    %v44 = vld [vmem:[#allocation5 + $0x20] sm:$0xff]
    %v45 = vld [vmem:[#allocation5 + $0x28] sm:$0xff]
    %v46 = vld [vmem:[#allocation5 + $0x30] sm:$0xff]
    %v47 = vld [vmem:[#allocation5 + $0x38] sm:$0xff]
    %v48 = vld [vmem:[#allocation2] sm:$0xff]
    %v49 = vld [vmem:[#allocation2 + $0x10] sm:$0xff]
    %v50 = vld [vmem:[#allocation2 + $0x20] sm:$0xff]
    %v51 = vld [vmem:[#allocation2 + $0x30] sm:$0xff]
    %v52 = vld [vmem:[#allocation2 + $0x40] sm:$0xff]
    %v53 = vld [vmem:[#allocation2 + $0x50] sm:$0xff]
    %v54 = vld [vmem:[#allocation2 + $0x60] sm:$0xff]
    %v55 = vld [vmem:[#allocation2 + $0x70] sm:$0xff]
    %v56 = vadd.f32 %v48, %v40
    %v57 = vadd.f32 %v49, %v41
    %v58 = vadd.f32 %v50, %v42
    %v59 = vadd.f32 %v51, %v43
    %v60 = vadd.f32 %v52, %v44
    %v61 = vadd.f32 %v53, %v45
    %v62 = vadd.f32 %v54, %v46
    %v63 = vadd.f32 %v55, %v47
    %64 = vst [vmem:[#allocation7] sm:$0xff] %v56
    %65 = vst [vmem:[#allocation7 + $0x10] sm:$0xff] %v57
    %66 = vst [vmem:[#allocation7 + $0x20] sm:$0xff] %v58
    %67 = vst [vmem:[#allocation7 + $0x30] sm:$0xff] %v59
    %68 = vst [vmem:[#allocation7 + $0x40] sm:$0xff] %v60
    %69 = vst [vmem:[#allocation7 + $0x50] sm:$0xff] %v61
    %70 = vst [vmem:[#allocation7 + $0x60] sm:$0xff] %v62
    %71 = vst [vmem:[#allocation7 + $0x70] sm:$0xff] %v63
    %v72 = vld [vmem:[#allocation2 + $0x8] sm:$0xff]
    %v73 = vld [vmem:[#allocation2 + $0x18] sm:$0xff]
    %v74 = vld [vmem:[#allocation2 + $0x28] sm:$0xff]
    %v75 = vld [vmem:[#allocation2 + $0x38] sm:$0xff]
    %v76 = vld [vmem:[#allocation2 + $0x48] sm:$0xff]
    %v77 = vld [vmem:[#allocation2 + $0x58] sm:$0xff]
    %v78 = vld [vmem:[#allocation2 + $0x68] sm:$0xff]
    %v79 = vld [vmem:[#allocation2 + $0x78] sm:$0xff]
    %v80 = vadd.f32 %v72, %v40
    %v81 = vadd.f32 %v73, %v41
    %v82 = vadd.f32 %v74, %v42
    %v83 = vadd.f32 %v75, %v43
    %v84 = vadd.f32 %v76, %v44
    %v85 = vadd.f32 %v77, %v45
    %v86 = vadd.f32 %v78, %v46
    %v87 = vadd.f32 %v79, %v47
    %88 = vst [vmem:[#allocation7 + $0x8] sm:$0xff] %v80
    %89 = vst [vmem:[#allocation7 + $0x18] sm:$0xff] %v81
    %90 = vst [vmem:[#allocation7 + $0x28] sm:$0xff] %v82
    %91 = vst [vmem:[#allocation7 + $0x38] sm:$0xff] %v83
    %92 = vst [vmem:[#allocation7 + $0x48] sm:$0xff] %v84
    %93 = vst [vmem:[#allocation7 + $0x58] sm:$0xff] %v85
    %94 = vst [vmem:[#allocation7 + $0x68] sm:$0xff] %v86
    %95 = vst [vmem:[#allocation7 + $0x78] sm:$0xff] %v87
    // Predicated region
    $region18: #{tpu_custom_call.1} parent=1 // pred_check
      _
    $region19: #{tpu_custom_call.1} parent=1 // pred_check_branch
      %97 = sbr.rel (0) target = $region21
    $region20: #{tpu_custom_call.1} parent=1 // pred_region
      %s99 = ssub.s32 2048, 2048
      %100 = vsyncadd [#allocation4], %s99
      %s101 = sshll.u32 [#allocation7], 4
      %s102 = int_to_ptr.vmem [resolvable:$true] %s101
      %107 = dma.vmem_to_hbm [thread:$0]  %s102, 2048, %s2, [#allocation4], 256, 256, 16
    $region21: #{tpu_custom_call.1} parent=1 // pred_fallthru
      _
    // Predicated region
    $region22: #{tpu_custom_call.1} parent=1 // pred_check
      _
    $region23: #{tpu_custom_call.1} parent=1 // pred_check_branch
      %109 = sbr.rel (0) target = $region25
    $region24: #{tpu_custom_call.1} parent=1 // pred_region
      %110 = dma.done [#allocation4], 2048
    $region25: #{tpu_custom_call.1} parent=1 // pred_fallthru
      _
    %111 = vsyncpa [#allocation3], 1
    %112 = vsyncpa [#allocation6], 1
    %113 = vsyncpa [#allocation4], 1

</llo_original>
